<compile_context>
chip_gen: v7x
topology: tpu7x:2x2x1
jax: 0.10.0
libtpu: 0.0.40
codegen_flags: <defaults>
</compile_context>

<pallas_src>
import functools

import jax
import jax.numpy as jnp
from jax import lax
from jax.experimental import pallas as pl
from jax.experimental.pallas import tpu as pltpu

EPS = 1e-5      # nn.LayerNorm default eps
LANE = 128      # TPU lane width


def _round_up(n, m):
    return (n + m - 1) // m * m


def fan_encode_kernel(x_ref, w1_ref, b1_ref, w2_ref, b2_ref, g_ref, bt_ref,
                      o_ref, *, inv_d):
    # x tile: (m_blk, DP) f32 in VMEM, lane-padded to 128.
    x = x_ref[...].astype(jnp.float32)

    # PositionWiseFFN: dense2(relu(dense1(x)))  (MXU matmuls, f32 accumulation).
    h = jnp.dot(x, w1_ref[...], preferred_element_type=jnp.float32) + b1_ref[...]
    h = jnp.maximum(h, 0.0)
    y = jnp.dot(h, w2_ref[...], preferred_element_type=jnp.float32) + b2_ref[...]

    # AddNorm: ln(dropout(y) + x); dropout == identity in eval mode.
    z = y + x

    # One-pass LayerNorm stats over the real D features.  Padded lanes of z are
    # exactly zero (zero-padded x / weights / biases), so full-row sums equal
    # sums over the first D lanes; divide by the true D (inv_d), not 128.
    s1 = jnp.sum(z, axis=-1, keepdims=True)
    s2 = jnp.sum(z * z, axis=-1, keepdims=True)
    mean = s1 * inv_d
    var = s2 * inv_d - mean * mean          # biased variance, matches PyTorch
    zn = (z - mean) * lax.rsqrt(var + EPS)

    # gamma/beta are zero in padded lanes -> padded output lanes are zero.
    o_ref[...] = (zn * g_ref[...] + bt_ref[...]).astype(o_ref.dtype)


def fan_encode(x, w1, b1, w2, b2, gamma, beta, *, block_m=512):
    """x: (B, 1, D) -> (B, 1, D), same semantics as FAN_encode.forward (eval)."""
    B, one, D = x.shape
    assert one == 1
    HID = w1.shape[1]

    DP = _round_up(D, LANE)     # lane-padded feature dim
    HP = _round_up(HID, LANE)   # lane-padded hidden dim

    # Fold (B, 1, D) -> (M, D) rows; pad rows up to a multiple of the row block.
    M = B
    m_blk = min(block_m, _round_up(M, 8))
    Mp = _round_up(M, m_blk)

    f32 = jnp.float32
    x2 = jnp.pad(x.reshape(M, D).astype(f32), ((0, Mp - M), (0, DP - D)))
    w1p = jnp.pad(w1.astype(f32), ((0, DP - D), (0, HP - HID)))
    b1p = jnp.pad(b1.reshape(1, HID).astype(f32), ((0, 0), (0, HP - HID)))
    w2p = jnp.pad(w2.astype(f32), ((0, HP - HID), (0, DP - D)))
    b2p = jnp.pad(b2.reshape(1, D).astype(f32), ((0, 0), (0, DP - D)))
    gp = jnp.pad(gamma.reshape(1, D).astype(f32), ((0, 0), (0, DP - D)))
    btp = jnp.pad(beta.reshape(1, D).astype(f32), ((0, 0), (0, DP - D)))

    kernel = functools.partial(fan_encode_kernel, inv_d=1.0 / D)

    # x / out stream through row blocks; parameters stay resident (constant map).
    row_spec = pl.BlockSpec((m_blk, DP), lambda i: (i, 0))
    const = lambda shape: pl.BlockSpec(shape, lambda i: (0, 0))

    out = pl.pallas_call(
        kernel,
        out_shape=jax.ShapeDtypeStruct((Mp, DP), x.dtype),
        grid=(Mp // m_blk,),
        in_specs=[
            row_spec,           # x tiles
            const((DP, HP)),    # w1 (resident)
            const((1, HP)),     # b1
            const((HP, DP)),    # w2
            const((1, DP)),     # b2
            const((1, DP)),     # gamma
            const((1, DP)),     # beta
        ],
        out_specs=row_spec,
        compiler_params=pltpu.CompilerParams(
            dimension_semantics=("parallel",)),
    )(x2, w1p, b1p, w2p, b2p, gp, btp)

    return out[:M, :D].reshape(B, 1, D)


def fan_encode_ref(x, w1, b1, w2, b2, gamma, beta):
    """Pure-JAX reference (mirrors the PyTorch forward in eval mode)."""
    x2 = x.reshape(x.shape[0], x.shape[-1]).astype(jnp.float32)
    h = jnp.maximum(x2 @ w1 + b1, 0.0)
    y = h @ w2 + b2
    z = y + x2
    mean = jnp.mean(z, axis=-1, keepdims=True)
    var = jnp.mean((z - mean) ** 2, axis=-1, keepdims=True)
    zn = (z - mean) / jnp.sqrt(var + EPS)
    out = zn * gamma + beta
    return out.reshape(x.shape)


if __name__ == "__main__":
    key = jax.random.PRNGKey(0)
    kx, k1, kb1, k2, kb2 = jax.random.split(key, 5)

    # Small shapes implied by the module: shape=32, ffn_num_hiddens=2*shape.
    B, D = 8, 32
    HID = 2 * D

    x = jax.random.normal(kx, (B, 1, D), dtype=jnp.float32)
    w1 = jax.random.normal(k1, (D, HID), dtype=jnp.float32) * (1.0 / jnp.sqrt(D))
    b1 = jax.random.normal(kb1, (1, HID), dtype=jnp.float32) * 0.01
    w2 = jax.random.normal(k2, (HID, D), dtype=jnp.float32) * (1.0 / jnp.sqrt(HID))
    b2 = jax.random.normal(kb2, (1, D), dtype=jnp.float32) * 0.01
    gamma = jnp.ones((1, D), dtype=jnp.float32)   # nn.LayerNorm weight init
    beta = jnp.zeros((1, D), dtype=jnp.float32)   # nn.LayerNorm bias init

    out = fan_encode(x, w1, b1, w2, b2, gamma, beta)
    out = jax.block_until_ready(out)
    ref = fan_encode_ref(x, w1, b1, w2, b2, gamma, beta)
    assert out.shape == (B, 1, D)
    assert jnp.allclose(out, ref, atol=1e-5, rtol=1e-5)

    # Secondary check: exercise the gridded / row-padded streaming path
    # (non-multiple batch, grid > 1) to validate the batched layout.
    Bbig = 1000
    xb = jax.random.normal(kx, (Bbig, 1, D), dtype=jnp.float32)
    outb = jax.block_until_ready(
        fan_encode(xb, w1, b1, w2, b2, gamma, beta, block_m=256))
    refb = fan_encode_ref(xb, w1, b1, w2, b2, gamma, beta)
    assert outb.shape == (Bbig, 1, D)
    assert jnp.allclose(outb, refb, atol=1e-5, rtol=1e-5)

    print("KERNEL_OK")
</pallas_src>

<mosaic_0001>
module attributes {stable_mosaic.version = 11 : i64} {
  func.func @fan_encode_kernel(%arg0: i32, %arg1: memref<8x128xf32, #tpu.memory_space<vmem>>, %arg2: memref<128x128xf32, #tpu.memory_space<vmem>>, %arg3: memref<1x128xf32, #tpu.memory_space<vmem>>, %arg4: memref<128x128xf32, #tpu.memory_space<vmem>>, %arg5: memref<1x128xf32, #tpu.memory_space<vmem>>, %arg6: memref<1x128xf32, #tpu.memory_space<vmem>>, %arg7: memref<1x128xf32, #tpu.memory_space<vmem>>, %arg8: memref<8x128xf32, #tpu.memory_space<vmem>>) attributes {dimension_semantics = [#tpu.dimension_semantics<parallel>], iteration_bounds = array<i64: 1>, scalar_prefetch = 0 : i64, scratch_operands = 0 : i64, tpu.core_type = #tpu.core_type<tc>, window_params = [{transform_indices = @transform_0, window_bounds = array<i64: 8, 128>}, {pipeline_mode = #tpu.pipeline_mode<synchronous>, transform_indices = @transform_1, window_bounds = array<i64: 128, 128>}, {pipeline_mode = #tpu.pipeline_mode<synchronous>, transform_indices = @transform_2, window_bounds = array<i64: 1, 128>}, {pipeline_mode = #tpu.pipeline_mode<synchronous>, transform_indices = @transform_3, window_bounds = array<i64: 128, 128>}, {pipeline_mode = #tpu.pipeline_mode<synchronous>, transform_indices = @transform_4, window_bounds = array<i64: 1, 128>}, {pipeline_mode = #tpu.pipeline_mode<synchronous>, transform_indices = @transform_5, window_bounds = array<i64: 1, 128>}, {pipeline_mode = #tpu.pipeline_mode<synchronous>, transform_indices = @transform_6, window_bounds = array<i64: 1, 128>}, {transform_indices = @transform_7, window_bounds = array<i64: 8, 128>}]} {
    %c0 = arith.constant 0 : index
    %c0_0 = arith.constant 0 : index
    %0 = vector.load %arg1[%c0, %c0_0] : memref<8x128xf32, #tpu.memory_space<vmem>>, vector<8x128xf32>
    %c0_1 = arith.constant 0 : index
    %c0_2 = arith.constant 0 : index
    %1 = vector.load %arg2[%c0_1, %c0_2] : memref<128x128xf32, #tpu.memory_space<vmem>>, vector<128x128xf32>
    %cst = arith.constant dense<0.000000e+00> : vector<8x128xf32>
    %2 = tpu.matmul %0, %1, %cst {dimension_numbers = #tpu.dot_dimension_numbers<[1], [0], [0], [1], [0, 0, 1, 1], [], []>} : vector<8x128xf32>, vector<128x128xf32>, vector<8x128xf32> -> vector<8x128xf32>
    %c0_3 = arith.constant 0 : index
    %c0_4 = arith.constant 0 : index
    %3 = vector.load %arg3[%c0_3, %c0_4] : memref<1x128xf32, #tpu.memory_space<vmem>>, vector<1x128xf32>
    %4 = vector.broadcast %3 : vector<1x128xf32> to vector<8x128xf32>
    %5 = arith.addf %2, %4 : vector<8x128xf32>
    %cst_5 = arith.constant 0.000000e+00 : f32
    %6 = vector.broadcast %cst_5 : f32 to vector<8x128xf32>
    %7 = arith.maximumf %5, %6 : vector<8x128xf32>
    %c0_6 = arith.constant 0 : index
    %c0_7 = arith.constant 0 : index
    %8 = vector.load %arg4[%c0_6, %c0_7] : memref<128x128xf32, #tpu.memory_space<vmem>>, vector<128x128xf32>
    %cst_8 = arith.constant dense<0.000000e+00> : vector<8x128xf32>
    %9 = tpu.matmul %7, %8, %cst_8 {dimension_numbers = #tpu.dot_dimension_numbers<[1], [0], [0], [1], [0, 0, 1, 1], [], []>} : vector<8x128xf32>, vector<128x128xf32>, vector<8x128xf32> -> vector<8x128xf32>
    %c0_9 = arith.constant 0 : index
    %c0_10 = arith.constant 0 : index
    %10 = vector.load %arg5[%c0_9, %c0_10] : memref<1x128xf32, #tpu.memory_space<vmem>>, vector<1x128xf32>
    %11 = vector.broadcast %10 : vector<1x128xf32> to vector<8x128xf32>
    %12 = arith.addf %9, %11 : vector<8x128xf32>
    %13 = arith.addf %12, %0 : vector<8x128xf32>
    %cst_11 = arith.constant dense<0.000000e+00> : vector<8xf32>
    %14 = vector.multi_reduction <add>, %13, %cst_11 [1] : vector<8x128xf32> to vector<8xf32>
    %15 = vector.shape_cast %14 : vector<8xf32> to vector<8x1xf32>
    %16 = arith.mulf %13, %13 : vector<8x128xf32>
    %cst_12 = arith.constant dense<0.000000e+00> : vector<8xf32>
    %17 = vector.multi_reduction <add>, %16, %cst_12 [1] : vector<8x128xf32> to vector<8xf32>
    %18 = vector.shape_cast %17 : vector<8xf32> to vector<8x1xf32>
    %cst_13 = arith.constant 3.125000e-02 : f32
    %19 = vector.broadcast %cst_13 : f32 to vector<8x1xf32>
    %20 = arith.mulf %15, %19 : vector<8x1xf32>
    %cst_14 = arith.constant 3.125000e-02 : f32
    %21 = vector.broadcast %cst_14 : f32 to vector<8x1xf32>
    %22 = arith.mulf %18, %21 : vector<8x1xf32>
    %23 = arith.mulf %20, %20 : vector<8x1xf32>
    %24 = arith.subf %22, %23 : vector<8x1xf32>
    %25 = vector.broadcast %20 : vector<8x1xf32> to vector<8x128xf32>
    %26 = arith.subf %13, %25 : vector<8x128xf32>
    %cst_15 = arith.constant 9.99999974E-6 : f32
    %27 = vector.broadcast %cst_15 : f32 to vector<8x1xf32>
    %28 = arith.addf %24, %27 : vector<8x1xf32>
    %29 = math.rsqrt %28 : vector<8x1xf32>
    %30 = vector.broadcast %29 : vector<8x1xf32> to vector<8x128xf32>
    %31 = arith.mulf %26, %30 : vector<8x128xf32>
    %c0_16 = arith.constant 0 : index
    %c0_17 = arith.constant 0 : index
    %32 = vector.load %arg6[%c0_16, %c0_17] : memref<1x128xf32, #tpu.memory_space<vmem>>, vector<1x128xf32>
    %33 = vector.broadcast %32 : vector<1x128xf32> to vector<8x128xf32>
    %34 = arith.mulf %31, %33 : vector<8x128xf32>
    %c0_18 = arith.constant 0 : index
    %c0_19 = arith.constant 0 : index
    %35 = vector.load %arg7[%c0_18, %c0_19] : memref<1x128xf32, #tpu.memory_space<vmem>>, vector<1x128xf32>
    %36 = vector.broadcast %35 : vector<1x128xf32> to vector<8x128xf32>
    %37 = arith.addf %34, %36 : vector<8x128xf32>
    %c0_20 = arith.constant 0 : index
    %c0_21 = arith.constant 0 : index
    %38 = vector.load %arg8[%c0_20, %c0_21] : memref<8x128xf32, #tpu.memory_space<vmem>>, vector<8x128xf32>
    tpu.vector_store %arg8[%c0_20, %c0_21], %37 {strides = array<i32>} : memref<8x128xf32, #tpu.memory_space<vmem>>, vector<8x128xf32>,
    return
  }
  func.func @transform_0(%arg0: i32) -> (i32, i32) {
    %c0_i32 = arith.constant 0 : i32
    %c0_i32_0 = arith.constant 0 : i32
    return %arg0, %c0_i32 : i32, i32
  }
  func.func @transform_1(%arg0: i32) -> (i32, i32) {
    %c0_i32 = arith.constant 0 : i32
    %c0_i32_0 = arith.constant 0 : i32
    %c0_i32_1 = arith.constant 0 : i32
    return %c0_i32, %c0_i32_0 : i32, i32
  }
  func.func @transform_2(%arg0: i32) -> (i32, i32) {
    %c0_i32 = arith.constant 0 : i32
    %c0_i32_0 = arith.constant 0 : i32
    %c0_i32_1 = arith.constant 0 : i32
    return %c0_i32, %c0_i32_0 : i32, i32
  }
  func.func @transform_3(%arg0: i32) -> (i32, i32) {
    %c0_i32 = arith.constant 0 : i32
    %c0_i32_0 = arith.constant 0 : i32
    %c0_i32_1 = arith.constant 0 : i32
    return %c0_i32, %c0_i32_0 : i32, i32
  }
  func.func @transform_4(%arg0: i32) -> (i32, i32) {
    %c0_i32 = arith.constant 0 : i32
    %c0_i32_0 = arith.constant 0 : i32
    %c0_i32_1 = arith.constant 0 : i32
    return %c0_i32, %c0_i32_0 : i32, i32
  }
  func.func @transform_5(%arg0: i32) -> (i32, i32) {
    %c0_i32 = arith.constant 0 : i32
    %c0_i32_0 = arith.constant 0 : i32
    %c0_i32_1 = arith.constant 0 : i32
    return %c0_i32, %c0_i32_0 : i32, i32
  }
  func.func @transform_6(%arg0: i32) -> (i32, i32) {
    %c0_i32 = arith.constant 0 : i32
    %c0_i32_0 = arith.constant 0 : i32
    %c0_i32_1 = arith.constant 0 : i32
    return %c0_i32, %c0_i32_0 : i32, i32
  }
  func.func @transform_7(%arg0: i32) -> (i32, i32) {
    %c0_i32 = arith.constant 0 : i32
    %c0_i32_0 = arith.constant 0 : i32
    return %arg0, %c0_i32 : i32, i32
  }
}

</mosaic_0001>

<llo_original>
// kernel: tpu_custom_call.1
$region0: #{tpu_custom_call.1}
  #allocation0 [shape = 'u32[]', space=smem, size = 0x4, offset = 0x4, fixed_abs, tag = 'smem constant byte address 0x4 - core index']
  #allocation1 [shape = 'u32[144,128]{1,0:T(1,128)}', space=vmem, size = 0x12000, scoped, tag = 'internal scratch']
  %s0 = inlined_call_operand.hbm [shape: f32[8,128], index: 0, kind: input, shape index: {}]
  %s1 = inlined_call_operand.hbm [shape: f32[128,128], index: 1, kind: input, shape index: {}]
  %s2 = inlined_call_operand.vmem [shape: f32[1,128], index: 2, kind: input, shape index: {}]
  %s3 = inlined_call_operand.hbm [shape: f32[128,128], index: 3, kind: input, shape index: {}]
  %s4 = inlined_call_operand.vmem [shape: f32[1,128], index: 4, kind: input, shape index: {}]
  %s5 = inlined_call_operand.vmem [shape: f32[1,128], index: 5, kind: input, shape index: {}]
  %s6 = inlined_call_operand.vmem [shape: f32[1,128], index: 6, kind: input, shape index: {}]
  %s7 = inlined_call_operand.hbm [shape: f32[8,128], index: 7, kind: output, shape index: {}]
  %s8 = sld [smem:[#allocation0]]
  $region50: #{tpu_custom_call.1} parent=0
    _
  %s10 = ssub.s32 1, %s8
  %s11 = scalar_select 0, %s10, %s8
  $region1: #{tpu_custom_call.1} parent=0
    #allocation2 [shape = 'u8[4096]{0}', space=vmem, size = 0x1000, scoped, tag = 'input window, operand 0, single buffered']
    #allocation3 [shape = 's32[1]{0}', space=sflag, size = 0x4, scoped, tag = 'scoped memory for tpu_custom_call.1']
    #allocation4 [shape = 's32[1]{0}', space=sflag, size = 0x4, scoped, tag = 'scoped memory for tpu_custom_call.1']
    #allocation5 [shape = 'u8[65536]{0}', space=vmem, size = 0x10000, scoped, tag = 'input window, operand 1, single buffered']
    #allocation6 [shape = 's32[1]{0}', space=sflag, size = 0x4, scoped, tag = 'scoped memory for tpu_custom_call.1']
    #allocation7 [shape = 'u8[65536]{0}', space=vmem, size = 0x10000, scoped, tag = 'input window, operand 3, single buffered']
    #allocation8 [shape = 'u8[4096]{0}', space=vmem, size = 0x1000, scoped, tag = 'output window, operand 0, single buffered']
    %12 = vsyncpa [#allocation3], 0
    %13 = vsyncpa [#allocation6], 0
    %14 = vsyncpa [#allocation4], 0
    // Predicated region
    $region2: #{tpu_custom_call.1} parent=1 // pred_check
      _
    $region3: #{tpu_custom_call.1} parent=1 // pred_check_branch
      %16 = sbr.rel (0) target = $region5
    $region4: #{tpu_custom_call.1} parent=1 // pred_region
      %s18 = ssub.s32 128, 128
      %19 = vsyncadd [#allocation3], %s18
      %s21 = sshll.u32 [#allocation2], 4
      %s22 = int_to_ptr.vmem [resolvable:$true] %s21
      %24 = dma.hbm_to_vmem [thread:$0]  %s0, 128, %s22, [#allocation3]
    $region5: #{tpu_custom_call.1} parent=1 // pred_fallthru
      _
    // Predicated region
    $region6: #{tpu_custom_call.1} parent=1 // pred_check
      _
    $region7: #{tpu_custom_call.1} parent=1 // pred_check_branch
      %26 = sbr.rel (0) target = $region9
    $region8: #{tpu_custom_call.1} parent=1 // pred_region
      %s28 = ssub.s32 2048, 2048
      %29 = vsyncadd [#allocation6], %s28
      %s30 = sshll.u32 [#allocation5], 4
      %s31 = int_to_ptr.vmem [resolvable:$true] %s30
      %36 = dma.hbm_to_vmem [thread:$0]  %s1, 2048, %s31, [#allocation6], 128, 128, 8
    $region9: #{tpu_custom_call.1} parent=1 // pred_fallthru
      _
    // Predicated region
    $region10: #{tpu_custom_call.1} parent=1 // pred_check
      _
    $region11: #{tpu_custom_call.1} parent=1 // pred_check_branch
      %38 = sbr.rel (0) target = $region13
    $region12: #{tpu_custom_call.1} parent=1 // pred_region
      _
    $region13: #{tpu_custom_call.1} parent=1 // pred_fallthru
      _
    // Predicated region
    $region14: #{tpu_custom_call.1} parent=1 // pred_check
      _
    $region15: #{tpu_custom_call.1} parent=1 // pred_check_branch
      %40 = sbr.rel (0) target = $region17
    $region16: #{tpu_custom_call.1} parent=1 // pred_region
      %s42 = ssub.s32 2048, 2048
      %43 = vsyncadd [#allocation6], %s42
      %s44 = sshll.u32 [#allocation7], 4
      %s45 = int_to_ptr.vmem [resolvable:$true] %s44
      %50 = dma.hbm_to_vmem [thread:$0]  %s3, 2048, %s45, [#allocation6], 128, 128, 8
    $region17: #{tpu_custom_call.1} parent=1 // pred_fallthru
      _
    // Predicated region
    $region18: #{tpu_custom_call.1} parent=1 // pred_check
      _
    $region19: #{tpu_custom_call.1} parent=1 // pred_check_branch
      %52 = sbr.rel (0) target = $region21
    $region20: #{tpu_custom_call.1} parent=1 // pred_region
      _
    $region21: #{tpu_custom_call.1} parent=1 // pred_fallthru
      _
    // Predicated region
    $region22: #{tpu_custom_call.1} parent=1 // pred_check
      _
    $region23: #{tpu_custom_call.1} parent=1 // pred_check_branch
      %54 = sbr.rel (0) target = $region25
    $region24: #{tpu_custom_call.1} parent=1 // pred_region
      _
    $region25: #{tpu_custom_call.1} parent=1 // pred_fallthru
      _
    // Predicated region
    $region26: #{tpu_custom_call.1} parent=1 // pred_check
      _
    $region27: #{tpu_custom_call.1} parent=1 // pred_check_branch
      %56 = sbr.rel (0) target = $region29
    $region28: #{tpu_custom_call.1} parent=1 // pred_region
      _
    $region29: #{tpu_custom_call.1} parent=1 // pred_fallthru
      _
    // Predicated region
    $region30: #{tpu_custom_call.1} parent=1 // pred_check
      _
    $region31: #{tpu_custom_call.1} parent=1 // pred_check_branch
      %58 = sbr.rel (0) target = $region33
    $region32: #{tpu_custom_call.1} parent=1 // pred_region
      %59 = dma.done [#allocation3], 128
    $region33: #{tpu_custom_call.1} parent=1 // pred_fallthru
      _
    // Predicated region
    $region34: #{tpu_custom_call.1} parent=1 // pred_check
      _
    $region35: #{tpu_custom_call.1} parent=1 // pred_check_branch
      %61 = sbr.rel (0) target = $region37
    $region36: #{tpu_custom_call.1} parent=1 // pred_region
      %62 = dma.done [#allocation6], 2048
    $region37: #{tpu_custom_call.1} parent=1 // pred_fallthru
      _
    // Predicated region
    $region38: #{tpu_custom_call.1} parent=1 // pred_check
      _
    $region39: #{tpu_custom_call.1} parent=1 // pred_check_branch
      %64 = sbr.rel (0) target = $region41
    $region40: #{tpu_custom_call.1} parent=1 // pred_region
      %65 = dma.done [#allocation6], 2048
    $region41: #{tpu_custom_call.1} parent=1 // pred_fallthru
      _
    %v66 = vld [vmem:[#allocation2] sm:$0xff]
    %v67 = vld [vmem:[#allocation5] sm:$0xff]
    %v68 = vld [vmem:[#allocation5 + $0x8] sm:$0xff]
    %v69 = vld [vmem:[#allocation5 + $0x10] sm:$0xff]
    %v70 = vld [vmem:[#allocation5 + $0x18] sm:$0xff]
    %v71 = vld [vmem:[#allocation5 + $0x20] sm:$0xff]
    %v72 = vld [vmem:[#allocation5 + $0x28] sm:$0xff]
    %v73 = vld [vmem:[#allocation5 + $0x30] sm:$0xff]
    %v74 = vld [vmem:[#allocation5 + $0x38] sm:$0xff]
    %v75 = vld [vmem:[#allocation5 + $0x40] sm:$0xff]
    %v76 = vld [vmem:[#allocation5 + $0x48] sm:$0xff]
    %v77 = vld [vmem:[#allocation5 + $0x50] sm:$0xff]
    %v78 = vld [vmem:[#allocation5 + $0x58] sm:$0xff]
    %v79 = vld [vmem:[#allocation5 + $0x60] sm:$0xff]
    %v80 = vld [vmem:[#allocation5 + $0x68] sm:$0xff]
    %v81 = vld [vmem:[#allocation5 + $0x70] sm:$0xff]
    %v82 = vld [vmem:[#allocation5 + $0x78] sm:$0xff]
    %v83 = vld [vmem:[%s2] sm:$0x1]
    %v85 = vlaneseq
    %v86 = vshrl.u32 %v85, 7
    %v87 = vsub.s32 0, %v86
    %v88 = vrot.slane %v83, %v87
    %90 = vmatprep.subr.mxu0 0.0
    %91 = vmatpush1.msra.mxu0 %v67
    %92 = vmatprep.subr.mxu0 0.0
    %93 = vmatpush1.msra.mxu0 %v68
    %94 = vmatprep.subr.mxu0 0.0
    %95 = vmatpush1.msra.mxu0 %v69
    %96 = vmatprep.subr.mxu0 0.0
    %97 = vmatpush1.msra.mxu0 %v70
    %98 = vmatprep.subr.mxu0 0.0
    %99 = vmatpush1.msra.mxu0 %v71
    %100 = vmatprep.subr.mxu0 0.0
    %101 = vmatpush1.msra.mxu0 %v72
    %102 = vmatprep.subr.mxu0 0.0
    %103 = vmatpush1.msra.mxu0 %v73
    %104 = vmatprep.subr.mxu0 0.0
    %105 = vmatpush1.msra.mxu0 %v74
    %106 = vmatprep.subr.mxu0 0.0
    %107 = vmatpush1.msra.mxu0 %v75
    %108 = vmatprep.subr.mxu0 0.0
    %109 = vmatpush1.msra.mxu0 %v76
    %110 = vmatprep.subr.mxu0 0.0
    %111 = vmatpush1.msra.mxu0 %v77
    %112 = vmatprep.subr.mxu0 0.0
    %113 = vmatpush1.msra.mxu0 %v78
    %114 = vmatprep.subr.mxu0 0.0
    %115 = vmatpush1.msra.mxu0 %v79
    %116 = vmatprep.subr.mxu0 0.0
    %117 = vmatpush1.msra.mxu0 %v80
    %118 = vmatprep.subr.mxu0 0.0
    %119 = vmatpush1.msra.mxu0 %v81
    %120 = vmatprep.subr.mxu0 0.0
    %121 = vmatpush1.msra.mxu0 %v82
    %122 = vmatprep.subr.mxu0 0.0
    %123 = vmatpush1.msra.mxu0 0.0
    %124 = vmatprep.subr.mxu0 0.0
    %125 = vmatpush1.msra.mxu0 0.0
    %126 = vmatprep.subr.mxu0 0.0
    %127 = vmatpush1.msra.mxu0 0.0
    %128 = vmatprep.subr.mxu0 0.0
    %129 = vmatpush1.msra.mxu0 0.0
    %130 = vmatprep.subr.mxu0 0.0
    %131 = vmatpush1.msra.mxu0 0.0
    %132 = vmatprep.subr.mxu0 0.0
    %133 = vmatpush1.msra.mxu0 0.0
    %134 = vmatprep.subr.mxu0 0.0
    %135 = vmatpush1.msra.mxu0 0.0
    %136 = vmatprep.subr.mxu0 0.0
    %137 = vmatpush1.msra.mxu0 0.0
    %138 = vmatprep.subr.mxu0 0.0
    %139 = vmatpush1.msra.mxu0 0.0
    %140 = vmatprep.subr.mxu0 0.0
    %141 = vmatpush1.msra.mxu0 0.0
    %142 = vmatprep.subr.mxu0 0.0
    %143 = vmatpush1.msra.mxu0 0.0
    %144 = vmatprep.subr.mxu0 0.0
    %145 = vmatpush1.msra.mxu0 0.0
    %146 = vmatprep.subr.mxu0 0.0
    %147 = vmatpush1.msra.mxu0 0.0
    %148 = vmatprep.subr.mxu0 0.0
    %149 = vmatpush1.msra.mxu0 0.0
    %150 = vmatprep.subr.mxu0 0.0
    %151 = vmatpush1.msra.mxu0 0.0
    %152 = vmatprep.subr.mxu0 0.0
    %153 = vmatpush1.msra.mxu0 0.0
    %154 = vmatprep.mubr.f32.mxu0 0.0
    %155 = vmatmul.mubr.f32.gmra.mrb[0].mxu0 %v66
    %v156 = vpop.f32.mrb[0].mxu0
    %v157 = vadd.f32 %v88, %v156
    %v158 = vpop.f32.mrb[0].mxu0
    %159 = vdwg.mxu0
    %v160 = vmax.f32 %v157, 0.0
    %v161 = vld [vmem:[#allocation7] sm:$0xff]
    %v162 = vld [vmem:[#allocation7 + $0x8] sm:$0xff]
    %v163 = vld [vmem:[#allocation7 + $0x10] sm:$0xff]
    %v164 = vld [vmem:[#allocation7 + $0x18] sm:$0xff]
    %v165 = vld [vmem:[#allocation7 + $0x20] sm:$0xff]
    %v166 = vld [vmem:[#allocation7 + $0x28] sm:$0xff]
    %v167 = vld [vmem:[#allocation7 + $0x30] sm:$0xff]
    %v168 = vld [vmem:[#allocation7 + $0x38] sm:$0xff]
    %v169 = vld [vmem:[#allocation7 + $0x40] sm:$0xff]
    %v170 = vld [vmem:[#allocation7 + $0x48] sm:$0xff]
    %v171 = vld [vmem:[#allocation7 + $0x50] sm:$0xff]
    %v172 = vld [vmem:[#allocation7 + $0x58] sm:$0xff]
    %v173 = vld [vmem:[#allocation7 + $0x60] sm:$0xff]
    %v174 = vld [vmem:[#allocation7 + $0x68] sm:$0xff]
    %v175 = vld [vmem:[#allocation7 + $0x70] sm:$0xff]
    %v176 = vld [vmem:[#allocation7 + $0x78] sm:$0xff]
    %v177 = vld [vmem:[%s4] sm:$0x1]
    %v179 = vlaneseq
    %v180 = vshrl.u32 %v179, 7
    %v181 = vsub.s32 0, %v180
    %v182 = vrot.slane %v177, %v181
    %184 = vmatprep.subr.mxu0 0.0
    %185 = vmatpush1.msra.mxu0 %v161
    %186 = vmatprep.subr.mxu0 0.0
    %187 = vmatpush1.msra.mxu0 %v162
    %188 = vmatprep.subr.mxu0 0.0
    %189 = vmatpush1.msra.mxu0 %v163
    %190 = vmatprep.subr.mxu0 0.0
    %191 = vmatpush1.msra.mxu0 %v164
    %192 = vmatprep.subr.mxu0 0.0
    %193 = vmatpush1.msra.mxu0 %v165
    %194 = vmatprep.subr.mxu0 0.0
    %195 = vmatpush1.msra.mxu0 %v166
    %196 = vmatprep.subr.mxu0 0.0
    %197 = vmatpush1.msra.mxu0 %v167
    %198 = vmatprep.subr.mxu0 0.0
    %199 = vmatpush1.msra.mxu0 %v168
    %200 = vmatprep.subr.mxu0 0.0
    %201 = vmatpush1.msra.mxu0 %v169
    %202 = vmatprep.subr.mxu0 0.0
    %203 = vmatpush1.msra.mxu0 %v170
    %204 = vmatprep.subr.mxu0 0.0
    %205 = vmatpush1.msra.mxu0 %v171
    %206 = vmatprep.subr.mxu0 0.0
    %207 = vmatpush1.msra.mxu0 %v172
    %208 = vmatprep.subr.mxu0 0.0
    %209 = vmatpush1.msra.mxu0 %v173
    %210 = vmatprep.subr.mxu0 0.0
    %211 = vmatpush1.msra.mxu0 %v174
    %212 = vmatprep.subr.mxu0 0.0
    %213 = vmatpush1.msra.mxu0 %v175
    %214 = vmatprep.subr.mxu0 0.0
    %215 = vmatpush1.msra.mxu0 %v176
    %216 = vmatprep.subr.mxu0 0.0
    %217 = vmatpush1.msra.mxu0 0.0
    %218 = vmatprep.subr.mxu0 0.0
    %219 = vmatpush1.msra.mxu0 0.0
    %220 = vmatprep.subr.mxu0 0.0
    %221 = vmatpush1.msra.mxu0 0.0
    %222 = vmatprep.subr.mxu0 0.0
    %223 = vmatpush1.msra.mxu0 0.0
    %224 = vmatprep.subr.mxu0 0.0
    %225 = vmatpush1.msra.mxu0 0.0
    %226 = vmatprep.subr.mxu0 0.0
    %227 = vmatpush1.msra.mxu0 0.0
    %228 = vmatprep.subr.mxu0 0.0
    %229 = vmatpush1.msra.mxu0 0.0
    %230 = vmatprep.subr.mxu0 0.0
    %231 = vmatpush1.msra.mxu0 0.0
    %232 = vmatprep.subr.mxu0 0.0
    %233 = vmatpush1.msra.mxu0 0.0
    %234 = vmatprep.subr.mxu0 0.0
    %235 = vmatpush1.msra.mxu0 0.0
    %236 = vmatprep.subr.mxu0 0.0
    %237 = vmatpush1.msra.mxu0 0.0
    %238 = vmatprep.subr.mxu0 0.0
    %239 = vmatpush1.msra.mxu0 0.0
    %240 = vmatprep.subr.mxu0 0.0
    %241 = vmatpush1.msra.mxu0 0.0
    %242 = vmatprep.subr.mxu0 0.0
    %243 = vmatpush1.msra.mxu0 0.0
    %244 = vmatprep.subr.mxu0 0.0
    %245 = vmatpush1.msra.mxu0 0.0
    %246 = vmatprep.subr.mxu0 0.0
    %247 = vmatpush1.msra.mxu0 0.0
    %248 = vmatprep.mubr.f32.mxu0 0.0
    %249 = vmatmul.mubr.f32.gmra.mrb[0].mxu0 %v160
    %v250 = vpop.f32.mrb[0].mxu0
    %v251 = vadd.f32 %v182, %v250
    %v252 = vpop.f32.mrb[0].mxu0
    %253 = vdwg.mxu0
    %v254 = vadd.f32 %v251, %v66
    %255 = vadd.xlane.f32.xlu0 %v254
    %v256 = vpop.xlane.xlu0 %255
    %v257 = vmul.f32 %v254, %v254
    %258 = vadd.xlane.f32.xlu0 %v257
    %v259 = vpop.xlane.xlu0 %258
    %v260 = vmul.f32 %v256, 0.03125
    %v261 = vmul.f32 %v259, 0.03125
    %v262 = vmul.f32 %v260, %v260
    %v263 = vsub.f32 %v261, %v262
    %v264 = vsub.f32 %v254, %v260
    %v265 = vadd.f32 %v263, 1e-05
    %v266 = vrsqrt.pop %v265
    %v267 = vmul.f32 %v264, %v266
    %v268 = vld [vmem:[%s5] sm:$0x1]
    %v270 = vlaneseq
    %v271 = vshrl.u32 %v270, 7
    %v272 = vsub.s32 0, %v271
    %v273 = vrot.slane %v268, %v272
    %v275 = vmul.f32 %v267, %v273
    %v276 = vld [vmem:[%s6] sm:$0x1]
    %v278 = vlaneseq
    %v279 = vshrl.u32 %v278, 7
    %v280 = vsub.s32 0, %v279
    %v281 = vrot.slane %v276, %v280
    %v283 = vadd.f32 %v275, %v281
    %284 = vst [vmem:[#allocation8] sm:$0xff] %v283
    // Predicated region
    $region42: #{tpu_custom_call.1} parent=1 // pred_check
      _
    $region43: #{tpu_custom_call.1} parent=1 // pred_check_branch
      %286 = sbr.rel (0) target = $region45
    $region44: #{tpu_custom_call.1} parent=1 // pred_region
      %s288 = ssub.s32 128, 128
      %289 = vsyncadd [#allocation4], %s288
      %s291 = sshll.u32 [#allocation8], 4
      %s292 = int_to_ptr.vmem [resolvable:$true] %s291
      %294 = dma.vmem_to_hbm [thread:$0]  %s292, 128, %s7, [#allocation4]
    $region45: #{tpu_custom_call.1} parent=1 // pred_fallthru
      _
    // Predicated region
    $region46: #{tpu_custom_call.1} parent=1 // pred_check
      _
    $region47: #{tpu_custom_call.1} parent=1 // pred_check_branch
      %296 = sbr.rel (0) target = $region49
    $region48: #{tpu_custom_call.1} parent=1 // pred_region
      %297 = dma.done [#allocation4], 128
    $region49: #{tpu_custom_call.1} parent=1 // pred_fallthru
      _
    %298 = vsyncpa [#allocation3], 1
    %299 = vsyncpa [#allocation6], 1
    %300 = vsyncpa [#allocation4], 1

</llo_original>
